<compile_context>
chip_gen: v5e
topology: v5e:2x2
jax: 0.10.0
libtpu: 0.0.40
codegen_flags: <defaults>
</compile_context>

<pallas_src>
import functools

import jax
import jax.numpy as jnp
import numpy as np
from jax.experimental import pallas as pl
from jax.experimental.pallas import tpu as pltpu


def _dropout_kernel(x_ref, bits_ref, o_ref, *, threshold: int, scale: float):
    # keep iff uniform uint32 >= threshold, where threshold = round(p * 2^32).
    keep = bits_ref[...] >= jnp.uint32(threshold)
    x = x_ref[...]
    scaled = x * jnp.asarray(scale, dtype=x.dtype)
    o_ref[...] = jnp.where(keep, scaled, jnp.zeros_like(scaled)).astype(o_ref.dtype)


def _dropout_reference(x: jax.Array, p: float, key: jax.Array) -> jax.Array:
    # Plain-JAX fallback for shapes that are not lane-alignable.
    keep = jax.random.bernoulli(key, 1.0 - p, x.shape)
    return jnp.where(keep, x / (1.0 - p), 0).astype(x.dtype)


def dropout(x: jax.Array, p: float = 0.5, *, training: bool = True,
            seed: int = 0) -> jax.Array:
    """Inverted dropout matching torch.nn.Dropout forward semantics."""
    if not training or p <= 0.0:
        return x
    if p >= 1.0:
        return jnp.zeros_like(x)

    key = jax.random.PRNGKey(seed)
    total = x.size

    # Choose a wide, lane-dense last dimension (multiple of 128).
    lanes = None
    for cand in (4096, 2048, 1024, 512, 256, 128):
        if total % cand == 0:
            lanes = cand
            break
    if lanes is None:
        # Odd-sized tensor: not worth a standalone Pallas launch.
        return _dropout_reference(x, p, key)

    rows = total // lanes
    itemsize = jnp.dtype(x.dtype).itemsize
    sublane = {1: 32, 2: 16, 4: 8}.get(itemsize, 8)  # dtype-native sublane tile

    # Row tiling: one block for small tensors; otherwise the largest
    # sublane-aligned divisor of `rows` within a conservative per-buffer VMEM
    # budget (input + uint32 bits + output, double-buffered, stays well under
    # the 32 MiB scoped limit and v7x's 64 MiB physical VMEM).
    budget_bytes = 4 * 1024 * 1024
    max_rows = max(sublane, budget_bytes // (lanes * 4))
    if rows <= max_rows:
        block_rows = rows
    else:
        block_rows = rows  # legal fallback: whole array as a single block
        br = (max_rows // sublane) * sublane
        while br >= sublane:
            if rows % br == 0:
                block_rows = br
                break
            br -= sublane

    x2d = x.reshape(rows, lanes)
    bits = jax.random.bits(key, (rows, lanes), dtype=jnp.uint32)

    threshold = min(int(round(p * 2.0 ** 32)), 2 ** 32 - 1)
    scale = 1.0 / (1.0 - p)

    spec = pl.BlockSpec((block_rows, lanes), lambda i: (i, 0))
    kernel = functools.partial(_dropout_kernel, threshold=threshold, scale=scale)

    out2d = pl.pallas_call(
        kernel,
        out_shape=jax.ShapeDtypeStruct((rows, lanes), x.dtype),
        grid=(rows // block_rows,),
        in_specs=[spec, spec],
        out_specs=spec,
        compiler_params=pltpu.CompilerParams(
            dimension_semantics=("parallel",),
        ),
    )(x2d, bits)

    return out2d.reshape(x.shape)


if __name__ == "__main__":
    key = jax.random.PRNGKey(0)
    # NCHW, as the PyTorch module would see it.
    x = jax.random.normal(key, (2, 4, 16, 16), dtype=jnp.float32)

    p = 0.5
    y = jax.block_until_ready(dropout(x, p=p, training=True, seed=1234))

    # Shape/dtype preserved.
    assert y.shape == x.shape and y.dtype == x.dtype

    y_np = np.asarray(y)
    x_np = np.asarray(x)
    # x is drawn from a continuous distribution, so exact zeros in x are
    # (almost surely) absent; y == 0 therefore identifies dropped elements.
    kept = y_np != 0.0
    np.testing.assert_allclose(
        y_np[kept], (x_np / (1.0 - p))[kept], rtol=1e-6, atol=1e-6)
    drop_frac = 1.0 - float(kept.mean())
    assert 0.3 < drop_frac < 0.7, f"unexpected drop fraction {drop_frac}"

    # Eval mode is identity.
    y_eval = jax.block_until_ready(dropout(x, p=p, training=False))
    np.testing.assert_array_equal(np.asarray(y_eval), x_np)

    print("KERNEL_OK")
</pallas_src>

<mosaic_0001>
module attributes {stable_mosaic.version = 11 : i64} {
  func.func @_dropout_kernel(%arg0: i32, %arg1: memref<1x2048xf32, #tpu.memory_space<vmem>>, %arg2: memref<1x2048xi32, #tpu.memory_space<vmem>>, %arg3: memref<1x2048xf32, #tpu.memory_space<vmem>>) attributes {dimension_semantics = [#tpu.dimension_semantics<parallel>], iteration_bounds = array<i64: 1>, scalar_prefetch = 0 : i64, scratch_operands = 0 : i64, tpu.core_type = #tpu.core_type<tc>, window_params = [{transform_indices = @transform_0, window_bounds = array<i64: 1, 2048>}, {transform_indices = @transform_1, window_bounds = array<i64: 1, 2048>}, {transform_indices = @transform_2, window_bounds = array<i64: 1, 2048>}]} {
    %c0 = arith.constant 0 : index
    %c0_0 = arith.constant 0 : index
    %0 = vector.load %arg2[%c0, %c0_0] : memref<1x2048xi32, #tpu.memory_space<vmem>>, vector<1x2048xi32>
    %c-2147483648_i32 = arith.constant -2147483648 : i32
    %1 = vector.broadcast %c-2147483648_i32 : i32 to vector<1x2048xi32>
    %2 = arith.cmpi uge, %0, %1 : vector<1x2048xi32>
    %c0_1 = arith.constant 0 : index
    %c0_2 = arith.constant 0 : index
    %3 = vector.load %arg1[%c0_1, %c0_2] : memref<1x2048xf32, #tpu.memory_space<vmem>>, vector<1x2048xf32>
    %cst = arith.constant 2.000000e+00 : f32
    %4 = vector.broadcast %cst : f32 to vector<1x2048xf32>
    %5 = arith.mulf %3, %4 : vector<1x2048xf32>
    %cst_3 = arith.constant 0.000000e+00 : f32
    %6 = vector.broadcast %cst_3 : f32 to vector<1x2048xf32>
    %7 = arith.select %2, %5, %6 : vector<1x2048xi1>, vector<1x2048xf32>
    %c0_4 = arith.constant 0 : index
    %c0_5 = arith.constant 0 : index
    %8 = vector.load %arg3[%c0_4, %c0_5] : memref<1x2048xf32, #tpu.memory_space<vmem>>, vector<1x2048xf32>
    tpu.vector_store %arg3[%c0_4, %c0_5], %7 {strides = array<i32>} : memref<1x2048xf32, #tpu.memory_space<vmem>>, vector<1x2048xf32>,
    return
  }
  func.func @transform_0(%arg0: i32) -> (i32, i32) {
    %c0_i32 = arith.constant 0 : i32
    %c0_i32_0 = arith.constant 0 : i32
    return %arg0, %c0_i32 : i32, i32
  }
  func.func @transform_1(%arg0: i32) -> (i32, i32) {
    %c0_i32 = arith.constant 0 : i32
    %c0_i32_0 = arith.constant 0 : i32
    return %arg0, %c0_i32 : i32, i32
  }
  func.func @transform_2(%arg0: i32) -> (i32, i32) {
    %c0_i32 = arith.constant 0 : i32
    %c0_i32_0 = arith.constant 0 : i32
    return %arg0, %c0_i32 : i32, i32
  }
}

</mosaic_0001>

<llo_original>
// kernel: tpu_custom_call.1
$region0: #{tpu_custom_call.1}
  #allocation0 [shape = 'u32[]', space=smem, size = 0x4, offset = 0x4, fixed_abs, tag = 'smem constant byte address 0x4 - core index']
  #allocation1 [shape = 'u32[72,128]{1,0:T(1,128)}', space=vmem, size = 0x9000, scoped, tag = 'internal scratch']
  %s0 = inlined_call_operand.hbm [shape: f32[1,2048], index: 0, kind: input, shape index: {}]
  %s1 = inlined_call_operand.hbm [shape: u32[1,2048], index: 1, kind: input, shape index: {}]
  %s2 = inlined_call_operand.hbm [shape: f32[1,2048], index: 2, kind: output, shape index: {}]
  %s3 = sld [smem:[#allocation0]]
  $region26: #{tpu_custom_call.1} parent=0
    _
  %s5 = ssub.s32 1, %s3
  %s6 = scalar_select 0, %s5, %s3
  $region1: #{tpu_custom_call.1} parent=0
    #allocation2 [shape = 'u8[8192]{0}', space=vmem, size = 0x2000, scoped, tag = 'input window, operand 0, single buffered']
    #allocation3 [shape = 's32[1]{0}', space=sflag, size = 0x4, scoped, tag = 'scoped memory for tpu_custom_call.1']
    #allocation4 [shape = 's32[1]{0}', space=sflag, size = 0x4, scoped, tag = 'scoped memory for tpu_custom_call.1']
    #allocation5 [shape = 'u8[8192]{0}', space=vmem, size = 0x2000, scoped, tag = 'input window, operand 1, single buffered']
    #allocation6 [shape = 's32[1]{0}', space=sflag, size = 0x4, scoped, tag = 'scoped memory for tpu_custom_call.1']
    #allocation7 [shape = 'u8[8192]{0}', space=vmem, size = 0x2000, scoped, tag = 'output window, operand 0, single buffered']
    %7 = vsyncpa [#allocation3], 0
    %8 = vsyncpa [#allocation6], 0
    %9 = vsyncpa [#allocation4], 0
    // Predicated region
    $region2: #{tpu_custom_call.1} parent=1 // pred_check
      _
    $region3: #{tpu_custom_call.1} parent=1 // pred_check_branch
      %11 = sbr.rel (0) target = $region5
    $region4: #{tpu_custom_call.1} parent=1 // pred_region
      %13 = vsyncadd [#allocation3], 0
      %s15 = sshll.u32 %s0, 4
      %s16 = int_to_ptr.hbm [resolvable:$true] %s15
      %s17 = sshll.u32 [#allocation2], 4
      %s18 = int_to_ptr.vmem [resolvable:$true] %s17
      %20 = dma.hbm_to_vmem [thread:$0]  %s16, 256, %s18, [#allocation3]
    $region5: #{tpu_custom_call.1} parent=1 // pred_fallthru
      _
    // Predicated region
    $region6: #{tpu_custom_call.1} parent=1 // pred_check
      _
    $region7: #{tpu_custom_call.1} parent=1 // pred_check_branch
      %22 = sbr.rel (0) target = $region9
    $region8: #{tpu_custom_call.1} parent=1 // pred_region
      %24 = vsyncadd [#allocation6], 0
      %s26 = sshll.u32 %s1, 4
      %s27 = int_to_ptr.hbm [resolvable:$true] %s26
      %s28 = sshll.u32 [#allocation5], 4
      %s29 = int_to_ptr.vmem [resolvable:$true] %s28
      %31 = dma.hbm_to_vmem [thread:$0]  %s27, 256, %s29, [#allocation6]
    $region9: #{tpu_custom_call.1} parent=1 // pred_fallthru
      _
    // Predicated region
    $region10: #{tpu_custom_call.1} parent=1 // pred_check
      _
    $region11: #{tpu_custom_call.1} parent=1 // pred_check_branch
      %33 = sbr.rel (0) target = $region13
    $region12: #{tpu_custom_call.1} parent=1 // pred_region
      %35 = dma.done [#allocation3], 256
    $region13: #{tpu_custom_call.1} parent=1 // pred_fallthru
      _
    // Predicated region
    $region14: #{tpu_custom_call.1} parent=1 // pred_check
      _
    $region15: #{tpu_custom_call.1} parent=1 // pred_check_branch
      %37 = sbr.rel (0) target = $region17
    $region16: #{tpu_custom_call.1} parent=1 // pred_region
      %39 = dma.done [#allocation6], 256
    $region17: #{tpu_custom_call.1} parent=1 // pred_fallthru
      _
    %v40 = vld [vmem:[#allocation5] sm:$0xff]
    %v41 = vld [vmem:[#allocation5 + $0x8] sm:$0xff]
    %v42 = vadd.s32 %v40, 2147483648
    %vm44 = vcmp.ge.s32.totalorder %v42, 0
    %v45 = vadd.s32 %v41, 2147483648
    %vm47 = vcmp.ge.s32.totalorder %v45, 0
    %v48 = vld [vmem:[#allocation2] sm:$0xff]
    %v49 = vld [vmem:[#allocation2 + $0x8] sm:$0xff]
    %v50 = vmul.f32 %v48, 2.0
    %v51 = vmul.f32 %v49, 2.0
    %v52 = vsel %vm44, %v50, 0.0
    %v53 = vsel %vm47, %v51, 0.0
    %54 = vst [vmem:[#allocation7] sm:$0xff] %v52
    %55 = vst [vmem:[#allocation7 + $0x8] sm:$0xff] %v53
    // Predicated region
    $region18: #{tpu_custom_call.1} parent=1 // pred_check
      _
    $region19: #{tpu_custom_call.1} parent=1 // pred_check_branch
      %57 = sbr.rel (0) target = $region21
    $region20: #{tpu_custom_call.1} parent=1 // pred_region
      %59 = vsyncadd [#allocation4], 0
      %s61 = sshll.u32 [#allocation7], 4
      %s62 = int_to_ptr.vmem [resolvable:$true] %s61
      %s63 = sshll.u32 %s2, 4
      %s64 = int_to_ptr.hbm [resolvable:$true] %s63
      %66 = dma.vmem_to_hbm [thread:$0]  %s62, 256, %s64, [#allocation4]
    $region21: #{tpu_custom_call.1} parent=1 // pred_fallthru
      _
    // Predicated region
    $region22: #{tpu_custom_call.1} parent=1 // pred_check
      _
    $region23: #{tpu_custom_call.1} parent=1 // pred_check_branch
      %68 = sbr.rel (0) target = $region25
    $region24: #{tpu_custom_call.1} parent=1 // pred_region
      %70 = dma.done [#allocation4], 256
    $region25: #{tpu_custom_call.1} parent=1 // pred_fallthru
      _
    %71 = vsyncpa [#allocation3], 1
    %72 = vsyncpa [#allocation6], 1
    %73 = vsyncpa [#allocation4], 1

</llo_original>
